<compile_context>
chip_gen: v7x
topology: tpu7x:2x2x1
jax: 0.10.0
libtpu: 0.0.40
codegen_flags: <defaults>
</compile_context>

<pallas_src>
import functools

import jax
import jax.numpy as jnp
from jax.experimental import pallas as pl
from jax.experimental.pallas import tpu as pltpu

_MIB = 1024 * 1024


def _round_up(x, m):
    return ((x + m - 1) // m) * m


def _cdiv(a, b):
    return (a + b - 1) // b


def autoencoder_kernel(x_ref, we_ref, be_ref, wd_ref, bd_ref, out_ref):
    # x_ref  : [TILE_N, Fp] f32 (zero-copy path) or bf16 (padded path)
    # we_ref : [Fp, Bp]     bf16   encoder weight, [in, out] layout (resident)
    # be_ref : [1, Bp]      f32    encoder bias (resident)
    # wd_ref : [Bp, Fp]     bf16   decoder weight, [in, out] layout (resident)
    # bd_ref : [1, Fp]      f32    decoder bias (resident)
    # out_ref: [TILE_N, Fp] bf16   reconstruction tile
    x = x_ref[...].astype(jnp.bfloat16)       # no-op if input already bf16

    # Encoder: relu(x @ We + be) — bf16 MXU inputs, f32 accumulation, f32 act.
    h = jnp.dot(x, we_ref[...], preferred_element_type=jnp.float32)
    h = jnp.maximum(h + be_ref[...], 0.0)

    # Decoder: sigmoid(h @ Wd + bd) — bias add + sigmoid in f32, store bf16.
    z = jnp.dot(h.astype(jnp.bfloat16), wd_ref[...],
                preferred_element_type=jnp.float32)
    out_ref[...] = jax.nn.sigmoid(z + bd_ref[...]).astype(out_ref.dtype)


def prepare_autoencoder_params(w_enc, b_enc, w_dec, b_dec):
    """One-time parameter prep (per weight update, NOT per forward call):
    transpose to [in, out], zero-pad F/B up to multiples of 128 (lane-dense),
    cast matmul weights to bf16, keep biases in f32."""
    b, f = w_enc.shape                       # PyTorch layout: [out, in]
    f_pad = _round_up(f, 128)
    b_pad = _round_up(b, 128)

    we_t = (jnp.zeros((f_pad, b_pad), jnp.float32)
            .at[:f, :b].set(jnp.asarray(w_enc, jnp.float32).T)
            .astype(jnp.bfloat16))
    wd_t = (jnp.zeros((b_pad, f_pad), jnp.float32)
            .at[:b, :f].set(jnp.asarray(w_dec, jnp.float32).T)
            .astype(jnp.bfloat16))
    be = jnp.zeros((1, b_pad), jnp.float32).at[0, :b].set(
        jnp.asarray(b_enc, jnp.float32))
    bd = jnp.zeros((1, f_pad), jnp.float32).at[0, :f].set(
        jnp.asarray(b_dec, jnp.float32))
    return we_t, be, wd_t, bd


def _choose_tile_n(n, tile_cap):
    """Pick a row tile (multiple of 8) so the last tile is (nearly) full,
    preferring a tile that divides n exactly (avoids any row padding)."""
    tile_cap = max(8, min(_round_up(tile_cap, 8), _round_up(n, 8)))
    num_tiles = _cdiv(n, tile_cap)
    tile_n = _round_up(_cdiv(n, num_tiles), 8)
    if n % tile_n != 0:
        lo = max(8, (tile_n // 2) // 8 * 8)
        for t in range(tile_n, lo - 1, -8):
            if n % t == 0:
                tile_n = t
                break
    return tile_n


@functools.partial(jax.jit, static_argnames=("tile_n", "single_buffer_weights"))
def autoencoder_forward(x, we_t, be, wd_t, bd, *, tile_n=1024,
                        single_buffer_weights=True):
    """x: [N, input_size] f32; params from prepare_autoencoder_params.
    Returns reconstruction [N, input_size] in bf16 (upcast in the caller only
    if f32 is truly required)."""
    n, f = x.shape
    f_pad, b_pad = we_t.shape

    # ---- VMEM budget, re-derived per chip generation (v7x: 64 MiB/TC). ----
    try:
        vmem_cap = int(pltpu.get_tpu_info().vmem_capacity_bytes)
    except Exception:
        vmem_cap = 64 * _MIB                         # safe on all generations
    usable = vmem_cap - vmem_cap // 8                # ~56 MiB v7x, ~112 MiB v6e

    wbuf_count = 1 if single_buffer_weights else 2
    weight_bytes = wbuf_count * (2 * f_pad * b_pad * 2 + (b_pad + f_pad) * 4)

    # Shrink the row-tile cap so (2x x-tile + 2x out-tile + weights) fits.
    per_row = 2 * f_pad * 4 + 2 * f_pad * 2          # x buffers (<=f32) + out (bf16)
    budget_rows = max(8, (usable - weight_bytes - 2 * _MIB) // per_row)
    tile_cap = max(8, min(tile_n, (budget_rows // 8) * 8))
    tile_n = _choose_tile_n(n, tile_cap)

    # ---- Input path: avoid the extra HBM pad/cast pass whenever possible. ----
    zero_copy = (f == f_pad) and (n % tile_n == 0)
    if zero_copy:
        xin = x                                       # f32; cast in-kernel
        rows = n
    else:
        rows = _round_up(n, tile_n)
        xin = jnp.zeros((rows, f_pad), jnp.bfloat16).at[:n, :f].set(
            x.astype(jnp.bfloat16))

    grid = (rows // tile_n,)
    x_bytes = 4 if zero_copy else 2

    footprint = (2 * tile_n * f_pad * x_bytes         # x tiles, double-buffered
                 + 2 * tile_n * f_pad * 2             # out tiles (bf16), double-buffered
                 + weight_bytes)                      # resident weights + biases
    vmem_limit = int(min(usable, max(16 * _MIB, footprint + 2 * _MIB)))

    flops = 4 * rows * f_pad * b_pad                  # two matmuls
    bytes_accessed = (rows * f_pad * x_bytes          # x in
                      + 2 * f_pad * b_pad * 2         # We + Wd (bf16)
                      + (b_pad + f_pad) * 4           # biases (f32)
                      + rows * f_pad * 2)             # out (bf16)

    if single_buffer_weights:
        def resident(shape):
            return pl.BlockSpec(shape, lambda i: (0, 0),
                                pipeline_mode=pl.Buffered(1))
    else:
        def resident(shape):
            return pl.BlockSpec(shape, lambda i: (0, 0))

    y = pl.pallas_call(
        autoencoder_kernel,
        out_shape=jax.ShapeDtypeStruct((rows, f_pad), jnp.bfloat16),
        grid_spec=pltpu.PrefetchScalarGridSpec(
            num_scalar_prefetch=0,
            grid=grid,
            in_specs=[
                pl.BlockSpec((tile_n, f_pad), lambda i: (i, 0)),   # x tile
                resident((f_pad, b_pad)),                          # We (resident)
                resident((1, b_pad)),                              # be (resident)
                resident((b_pad, f_pad)),                          # Wd (resident)
                resident((1, f_pad)),                              # bd (resident)
            ],
            out_specs=pl.BlockSpec((tile_n, f_pad), lambda i: (i, 0)),
        ),
        compiler_params=pltpu.CompilerParams(
            dimension_semantics=("parallel",),
            vmem_limit_bytes=vmem_limit,
        ),
        cost_estimate=pl.CostEstimate(
            flops=flops,
            transcendentals=rows * f_pad,
            bytes_accessed=bytes_accessed,
        ),
    )(xin, we_t, be, wd_t, bd)

    if (rows, f_pad) != (n, f):
        y = y[:n, :f]
    return y


def init_autoencoder_params(key, input_size, eta):
    """Deterministic init mimicking nn.Linear default (uniform +-1/sqrt(fan_in))."""
    bottleneck = int(eta * input_size)
    k_we, k_be, k_wd, k_bd = jax.random.split(key, 4)
    bound_e = 1.0 / jnp.sqrt(jnp.float32(input_size))
    bound_d = 1.0 / jnp.sqrt(jnp.float32(bottleneck))
    w_enc = jax.random.uniform(k_we, (bottleneck, input_size), jnp.float32,
                               -bound_e, bound_e)
    b_enc = jax.random.uniform(k_be, (bottleneck,), jnp.float32, -bound_e, bound_e)
    w_dec = jax.random.uniform(k_wd, (input_size, bottleneck), jnp.float32,
                               -bound_d, bound_d)
    b_dec = jax.random.uniform(k_bd, (input_size,), jnp.float32, -bound_d, bound_d)
    return w_enc, b_enc, w_dec, b_dec


def reference_forward_f32(x, w_enc, b_enc, w_dec, b_dec):
    h = jnp.maximum(x @ w_enc.T + b_enc, 0.0)
    return jax.nn.sigmoid(h @ w_dec.T + b_dec)


def reference_forward_bf16(x, w_enc, b_enc, w_dec, b_dec):
    """Same bf16-input / f32-accumulate recipe as the kernel, for tight checks."""
    xb = x.astype(jnp.bfloat16)
    web = jnp.asarray(w_enc, jnp.float32).T.astype(jnp.bfloat16)
    wdb = jnp.asarray(w_dec, jnp.float32).T.astype(jnp.bfloat16)
    h = jnp.dot(xb, web, preferred_element_type=jnp.float32) + b_enc
    h = jnp.maximum(h, 0.0)
    z = jnp.dot(h.astype(jnp.bfloat16), wdb,
                preferred_element_type=jnp.float32) + b_dec
    return jax.nn.sigmoid(z)


def _run_forward(x, params, tile_n):
    try:
        y = autoencoder_forward(x, *params, tile_n=tile_n)
        return jax.block_until_ready(y)
    except Exception:
        # Fallback if this JAX build rejects pipeline_mode=pl.Buffered(1) on
        # the resident-weight BlockSpecs: use default double-buffering.
        y = autoencoder_forward(x, *params, tile_n=tile_n,
                                single_buffer_weights=False)
        return jax.block_until_ready(y)


def _check(y, x, w_enc, b_enc, w_dec, b_dec):
    y32 = y.astype(jnp.float32)
    y_ref_bf16 = reference_forward_bf16(x, w_enc, b_enc, w_dec, b_dec)
    y_ref_f32 = reference_forward_f32(x, w_enc, b_enc, w_dec, b_dec)
    # Tight check vs bf16-matched reference (extra slack for bf16 output store).
    assert jnp.allclose(y32, y_ref_bf16, atol=8e-3, rtol=8e-3), \
        float(jnp.max(jnp.abs(y32 - y_ref_bf16)))
    # Loose check vs the pure-f32 PyTorch forward (bf16 quantization only).
    assert jnp.allclose(y32, y_ref_f32, atol=6e-2, rtol=6e-2), \
        float(jnp.max(jnp.abs(y32 - y_ref_f32)))


if __name__ == "__main__":
    key = jax.random.PRNGKey(0)
    k1_params, k1_x, k2_params, k2_x = jax.random.split(key, 4)

    # --- Test 1: tiny shapes consistent with the module (padded path). ---
    # N samples with `input_size` features, eta=0.5 -> bottleneck = 16.
    N, INPUT_SIZE, ETA = 100, 32, 0.5
    w_enc, b_enc, w_dec, b_dec = init_autoencoder_params(k1_params, INPUT_SIZE, ETA)
    x = jax.random.normal(k1_x, (N, INPUT_SIZE), jnp.float32)
    params = prepare_autoencoder_params(w_enc, b_enc, w_dec, b_dec)
    # Small tile so the demo exercises multiple grid steps with resident
    # weights and a ragged (padded) final row tile.
    y = _run_forward(x, params, tile_n=32)
    assert y.shape == (N, INPUT_SIZE)
    _check(y, x, w_enc, b_enc, w_dec, b_dec)

    # --- Test 2: lane-aligned F (zero-copy path: x fed as f32, no pad pass). ---
    N2, F2, ETA2 = 600, 256, 0.5
    w_enc2, b_enc2, w_dec2, b_dec2 = init_autoencoder_params(k2_params, F2, ETA2)
    x2 = jax.random.normal(k2_x, (N2, F2), jnp.float32)
    params2 = prepare_autoencoder_params(w_enc2, b_enc2, w_dec2, b_dec2)
    y2 = _run_forward(x2, params2, tile_n=256)   # -> tile 200, grid 3, no copy
    assert y2.shape == (N2, F2)
    _check(y2, x2, w_enc2, b_enc2, w_dec2, b_dec2)

    # MSE as produced by new_tuple (plain JAX; not the hot path).
    mse = jnp.mean((y.astype(jnp.float32) - x) ** 2)
    jax.block_until_ready(mse)

    print("KERNEL_OK")
</pallas_src>

<mosaic_0001>
module attributes {stable_mosaic.version = 11 : i64} {
  func.func @autoencoder_kernel(%arg0: i32, %arg1: memref<32x128xbf16, #tpu.memory_space<vmem>>, %arg2: memref<128x128xbf16, #tpu.memory_space<vmem>>, %arg3: memref<1x128xf32, #tpu.memory_space<vmem>>, %arg4: memref<128x128xbf16, #tpu.memory_space<vmem>>, %arg5: memref<1x128xf32, #tpu.memory_space<vmem>>, %arg6: memref<32x128xbf16, #tpu.memory_space<vmem>>) attributes {dimension_semantics = [#tpu.dimension_semantics<parallel>], iteration_bounds = array<i64: 4>, scalar_prefetch = 0 : i64, scratch_operands = 0 : i64, tpu.core_type = #tpu.core_type<tc>, window_params = [{transform_indices = @transform_0, window_bounds = array<i64: 32, 128>}, {pipeline_mode = #tpu.pipeline_mode<synchronous>, transform_indices = @transform_1, window_bounds = array<i64: 128, 128>}, {pipeline_mode = #tpu.pipeline_mode<synchronous>, transform_indices = @transform_2, window_bounds = array<i64: 1, 128>}, {pipeline_mode = #tpu.pipeline_mode<synchronous>, transform_indices = @transform_3, window_bounds = array<i64: 128, 128>}, {pipeline_mode = #tpu.pipeline_mode<synchronous>, transform_indices = @transform_4, window_bounds = array<i64: 1, 128>}, {transform_indices = @transform_5, window_bounds = array<i64: 32, 128>}]} {
    %c0 = arith.constant 0 : index
    %c0_0 = arith.constant 0 : index
    %0 = vector.load %arg1[%c0, %c0_0] : memref<32x128xbf16, #tpu.memory_space<vmem>>, vector<32x128xbf16>
    %c0_1 = arith.constant 0 : index
    %c0_2 = arith.constant 0 : index
    %1 = vector.load %arg2[%c0_1, %c0_2] : memref<128x128xbf16, #tpu.memory_space<vmem>>, vector<128x128xbf16>
    %cst = arith.constant dense<0.000000e+00> : vector<32x128xf32>
    %2 = tpu.matmul %0, %1, %cst {dimension_numbers = #tpu.dot_dimension_numbers<[1], [0], [0], [1], [0, 0, 1, 1], [], []>} : vector<32x128xbf16>, vector<128x128xbf16>, vector<32x128xf32> -> vector<32x128xf32>
    %c0_3 = arith.constant 0 : index
    %c0_4 = arith.constant 0 : index
    %3 = vector.load %arg3[%c0_3, %c0_4] : memref<1x128xf32, #tpu.memory_space<vmem>>, vector<1x128xf32>
    %4 = vector.broadcast %3 : vector<1x128xf32> to vector<32x128xf32>
    %5 = arith.addf %2, %4 : vector<32x128xf32>
    %cst_5 = arith.constant 0.000000e+00 : f32
    %6 = vector.broadcast %cst_5 : f32 to vector<32x128xf32>
    %7 = arith.maximumf %5, %6 : vector<32x128xf32>
    %8 = arith.truncf %7 : vector<32x128xf32> to vector<32x128xbf16>
    %c0_6 = arith.constant 0 : index
    %c0_7 = arith.constant 0 : index
    %9 = vector.load %arg4[%c0_6, %c0_7] : memref<128x128xbf16, #tpu.memory_space<vmem>>, vector<128x128xbf16>
    %cst_8 = arith.constant dense<0.000000e+00> : vector<32x128xf32>
    %10 = tpu.matmul %8, %9, %cst_8 {dimension_numbers = #tpu.dot_dimension_numbers<[1], [0], [0], [1], [0, 0, 1, 1], [], []>} : vector<32x128xbf16>, vector<128x128xbf16>, vector<32x128xf32> -> vector<32x128xf32>
    %c0_9 = arith.constant 0 : index
    %c0_10 = arith.constant 0 : index
    %11 = vector.load %arg5[%c0_9, %c0_10] : memref<1x128xf32, #tpu.memory_space<vmem>>, vector<1x128xf32>
    %12 = vector.broadcast %11 : vector<1x128xf32> to vector<32x128xf32>
    %13 = arith.addf %10, %12 : vector<32x128xf32>
    %14 = arith.negf %13 : vector<32x128xf32>
    %15 = math.exp %14 : vector<32x128xf32>
    %cst_11 = arith.constant 1.000000e+00 : f32
    %16 = vector.broadcast %cst_11 : f32 to vector<32x128xf32>
    %17 = arith.addf %16, %15 : vector<32x128xf32>
    %18 = arith.divf %16, %17 : vector<32x128xf32>
    %19 = arith.truncf %18 : vector<32x128xf32> to vector<32x128xbf16>
    %c0_12 = arith.constant 0 : index
    %c0_13 = arith.constant 0 : index
    %20 = vector.load %arg6[%c0_12, %c0_13] : memref<32x128xbf16, #tpu.memory_space<vmem>>, vector<32x128xbf16>
    tpu.vector_store %arg6[%c0_12, %c0_13], %19 {strides = array<i32>} : memref<32x128xbf16, #tpu.memory_space<vmem>>, vector<32x128xbf16>,
    return
  }
  func.func @transform_0(%arg0: i32) -> (i32, i32) {
    %c0_i32 = arith.constant 0 : i32
    %c0_i32_0 = arith.constant 0 : i32
    return %arg0, %c0_i32 : i32, i32
  }
  func.func @transform_1(%arg0: i32) -> (i32, i32) {
    %c0_i32 = arith.constant 0 : i32
    %c0_i32_0 = arith.constant 0 : i32
    %c0_i32_1 = arith.constant 0 : i32
    return %c0_i32, %c0_i32_0 : i32, i32
  }
  func.func @transform_2(%arg0: i32) -> (i32, i32) {
    %c0_i32 = arith.constant 0 : i32
    %c0_i32_0 = arith.constant 0 : i32
    %c0_i32_1 = arith.constant 0 : i32
    return %c0_i32, %c0_i32_0 : i32, i32
  }
  func.func @transform_3(%arg0: i32) -> (i32, i32) {
    %c0_i32 = arith.constant 0 : i32
    %c0_i32_0 = arith.constant 0 : i32
    %c0_i32_1 = arith.constant 0 : i32
    return %c0_i32, %c0_i32_0 : i32, i32
  }
  func.func @transform_4(%arg0: i32) -> (i32, i32) {
    %c0_i32 = arith.constant 0 : i32
    %c0_i32_0 = arith.constant 0 : i32
    %c0_i32_1 = arith.constant 0 : i32
    return %c0_i32, %c0_i32_0 : i32, i32
  }
  func.func @transform_5(%arg0: i32) -> (i32, i32) {
    %c0_i32 = arith.constant 0 : i32
    %c0_i32_0 = arith.constant 0 : i32
    return %arg0, %c0_i32 : i32, i32
  }
}

module attributes {stable_mosaic.version = 11 : i64} {
  func.func @autoencoder_kernel(%arg0: i32, %arg1: memref<32x128xbf16, #tpu.memory_space<vmem>>, %arg2: memref<128x128xbf16, #tpu.memory_space<vmem>>, %arg3: memref<1x128xf32, #tpu.memory_space<vmem>>, %arg4: memref<128x128xbf16, #tpu.memory_space<vmem>>, %arg5: memref<1x128xf32, #tpu.memory_space<vmem>>, %arg6: memref<32x128xbf16, #tpu.memory_space<vmem>>) attributes {dimension_semantics = [#tpu.dimension_semantics<parallel>], iteration_bounds = array<i64: 4>, scalar_prefetch = 0 : i64, scratch_operands = 0 : i64, tpu.core_type = #tpu.core_type<tc>, window_params = [{transform_indices = @transform_0, window_bounds = array<i64: 32, 128>}, {pipeline_mode = #tpu.pipeline_mode<synchronous>, transform_indices = @transform_1, window_bounds = array<i64: 128, 128>}, {pipeline_mode = #tpu.pipeline_mode<synchronous>, transform_indices = @transform_2, window_bounds = array<i64: 1, 128>}, {pipeline_mode = #tpu.pipeline_mode<synchronous>, transform_indices = @transform_3, window_bounds = array<i64: 128, 128>}, {pipeline_mode = #tpu.pipeline_mode<synchronous>, transform_indices = @transform_4, window_bounds = array<i64: 1, 128>}, {transform_indices = @transform_5, window_bounds = array<i64: 32, 128>}]} {
    %c0 = arith.constant 0 : index
    %c0_0 = arith.constant 0 : index
    %0 = vector.load %arg1[%c0, %c0_0] : memref<32x128xbf16, #tpu.memory_space<vmem>>, vector<32x128xbf16>
    %c0_1 = arith.constant 0 : index
    %c0_2 = arith.constant 0 : index
    %1 = vector.load %arg2[%c0_1, %c0_2] : memref<128x128xbf16, #tpu.memory_space<vmem>>, vector<128x128xbf16>
    %cst = arith.constant dense<0.000000e+00> : vector<32x128xf32>
    %2 = tpu.matmul %0, %1, %cst {dimension_numbers = #tpu.dot_dimension_numbers<[1], [0], [0], [1], [0, 0, 1, 1], [], []>} : vector<32x128xbf16>, vector<128x128xbf16>, vector<32x128xf32> -> vector<32x128xf32>
    %c0_3 = arith.constant 0 : index
    %c0_4 = arith.constant 0 : index
    %3 = vector.load %arg3[%c0_3, %c0_4] : memref<1x128xf32, #tpu.memory_space<vmem>>, vector<1x128xf32>
    %4 = vector.broadcast %3 : vector<1x128xf32> to vector<32x128xf32>
    %5 = arith.addf %2, %4 : vector<32x128xf32>
    %cst_5 = arith.constant 0.000000e+00 : f32
    %6 = vector.broadcast %cst_5 : f32 to vector<32x128xf32>
    %7 = arith.maximumf %5, %6 : vector<32x128xf32>
    %8 = arith.truncf %7 : vector<32x128xf32> to vector<32x128xbf16>
    %c0_6 = arith.constant 0 : index
    %c0_7 = arith.constant 0 : index
    %9 = vector.load %arg4[%c0_6, %c0_7] : memref<128x128xbf16, #tpu.memory_space<vmem>>, vector<128x128xbf16>
    %cst_8 = arith.constant dense<0.000000e+00> : vector<32x128xf32>
    %10 = tpu.matmul %8, %9, %cst_8 {dimension_numbers = #tpu.dot_dimension_numbers<[1], [0], [0], [1], [0, 0, 1, 1], [], []>} : vector<32x128xbf16>, vector<128x128xbf16>, vector<32x128xf32> -> vector<32x128xf32>
    %c0_9 = arith.constant 0 : index
    %c0_10 = arith.constant 0 : index
    %11 = vector.load %arg5[%c0_9, %c0_10] : memref<1x128xf32, #tpu.memory_space<vmem>>, vector<1x128xf32>
    %12 = vector.broadcast %11 : vector<1x128xf32> to vector<32x128xf32>
    %13 = arith.addf %10, %12 : vector<32x128xf32>
    %14 = arith.negf %13 : vector<32x128xf32>
    %15 = math.exp %14 : vector<32x128xf32>
    %cst_11 = arith.constant 1.000000e+00 : f32
    %16 = vector.broadcast %cst_11 : f32 to vector<32x128xf32>
    %17 = arith.addf %16, %15 : vector<32x128xf32>
    %18 = arith.divf %16, %17 : vector<32x128xf32>
    %19 = arith.truncf %18 : vector<32x128xf32> to vector<32x128xbf16>
    %c0_12 = arith.constant 0 : index
    %c0_13 = arith.constant 0 : index
    %20 = vector.load %arg6[%c0_12, %c0_13] : memref<32x128xbf16, #tpu.memory_space<vmem>>, vector<32x128xbf16>
    tpu.vector_store %arg6[%c0_12, %c0_13], %19 {strides = array<i32>} : memref<32x128xbf16, #tpu.memory_space<vmem>>, vector<32x128xbf16>,
    return
  }
  func.func @transform_0(%arg0: i32) -> (i32, i32) {
    %c0_i32 = arith.constant 0 : i32
    %c0_i32_0 = arith.constant 0 : i32
    return %arg0, %c0_i32 : i32, i32
  }
  func.func @transform_1(%arg0: i32) -> (i32, i32) {
    %c0_i32 = arith.constant 0 : i32
    %c0_i32_0 = arith.constant 0 : i32
    %c0_i32_1 = arith.constant 0 : i32
    return %c0_i32, %c0_i32_0 : i32, i32
  }
  func.func @transform_2(%arg0: i32) -> (i32, i32) {
    %c0_i32 = arith.constant 0 : i32
    %c0_i32_0 = arith.constant 0 : i32
    %c0_i32_1 = arith.constant 0 : i32
    return %c0_i32, %c0_i32_0 : i32, i32
  }
  func.func @transform_3(%arg0: i32) -> (i32, i32) {
    %c0_i32 = arith.constant 0 : i32
    %c0_i32_0 = arith.constant 0 : i32
    %c0_i32_1 = arith.constant 0 : i32
    return %c0_i32, %c0_i32_0 : i32, i32
  }
  func.func @transform_4(%arg0: i32) -> (i32, i32) {
    %c0_i32 = arith.constant 0 : i32
    %c0_i32_0 = arith.constant 0 : i32
    %c0_i32_1 = arith.constant 0 : i32
    return %c0_i32, %c0_i32_0 : i32, i32
  }
  func.func @transform_5(%arg0: i32) -> (i32, i32) {
    %c0_i32 = arith.constant 0 : i32
    %c0_i32_0 = arith.constant 0 : i32
    return %arg0, %c0_i32 : i32, i32
  }
}

</mosaic_0001>

<llo_original>
// kernel: autoencoder_forward.1
$region0: #{autoencoder_forward.1}
  #allocation0 [shape = 'u32[]', space=smem, size = 0x4, offset = 0x4, fixed_abs, tag = 'smem constant byte address 0x4 - core index']
  #allocation1 [shape = 'u32[144,128]{1,0:T(1,128)}', space=vmem, size = 0x12000, scoped, tag = 'internal scratch']
  %s0 = inlined_call_operand.vmem [shape: bf16[128,128], index: 0, kind: input, shape index: {}]
  %s1 = inlined_call_operand.vmem [shape: bf16[128,128], index: 1, kind: input, shape index: {}]
  %s2 = inlined_call_operand.vmem [shape: f32[1,128], index: 2, kind: input, shape index: {}]
  %s3 = inlined_call_operand.vmem [shape: bf16[128,128], index: 3, kind: input, shape index: {}]
  %s4 = inlined_call_operand.vmem [shape: f32[1,128], index: 4, kind: input, shape index: {}]
  %s5 = inlined_call_operand.vmem [shape: bf16[128,128], index: 5, kind: output, shape index: {}]
  %s6 = sld [smem:[#allocation0]]
  $region53: #{autoencoder_forward.1} parent=0
    _
  %s8 = ssub.s32 1, %s6
  %s9 = scalar_select 0, %s8, %s6
  loop: start=0, step=1, limit=6
  $region2: #{autoencoder_forward.1} parent=0 // loop_pre_header
    _
  $region3: #{autoencoder_forward.1} parent=0 // loop_header
    %s11 = sphi 0, %s15
    %p12 = scmp.ge.s32.totalorder %s11, 6
    %s21 = sphi 0, %s23
    %s24 = sphi 0, %s21
    %s25 = sphi 0, %s24
    %s41 = sphi 0, %s25
    %s45 = sphi 0, %s45
    %s47 = sphi 0, %s45
    %s48 = sphi 0, %s47
    %s62 = sphi 0, %s48
    %s66 = sphi 0, %s66
    %s68 = sphi 0, %s66
    %s69 = sphi 0, %s68
    %s83 = sphi 0, %s69
    %s87 = sphi 0, %s87
    %s89 = sphi 0, %s87
    %s90 = sphi 0, %s89
    %s104 = sphi 0, %s90
    %s108 = sphi 0, %s108
    %s110 = sphi 0, %s108
    %s111 = sphi 0, %s110
    %s125 = sphi 0, %s111
    %s131 = sphi 0, %s133
    %s134 = sphi 0, %s131
    %s135 = sphi 0, %s134
    %s151 = sphi 0, %s135
  $region4: #{autoencoder_forward.1} parent=0 // loop_header_branch
    %14 = sbr.rel (%p12) target = $region8
  $region5: #{autoencoder_forward.1} parent=0 // loop_body
    %s16 = ssub.s32 %s11, 1
    %s17 = ssub.s32 %s11, 2
    %s18 = sadd.s32 %s11, 1
    %s19 = ssub.s32 %s11, %s18
    %p20 = scmp.eq.s32.totalorder %s19, 0
    %s22 = sadd.s32 %s21, 1
    %s23 = scalar_select %p20, %s21, %s22
    %p26 = pneg %p20
    %p27 = scmp.eq.s32.totalorder %s11, 3
    %p28 = por %p26, %p27
    %p29 = scmp.ne.s32.totalorder %s21, %s24
    %p30 = scmp.eq.s32.totalorder %s11, 0
    %p31 = por %p29, %p30
    %p32 = scmp.ne.s32.totalorder %s21, %s24
    %p33 = scmp.eq.s32.totalorder %s16, 3
    %p34 = por %p32, %p33
    %p35 = scmp.ne.s32.totalorder %s24, %s25
    %p36 = scmp.eq.s32.totalorder %s16, 0
    %p37 = por %p35, %p36
    %p38 = scmp.ne.s32.totalorder %s24, %s25
    %p39 = scmp.eq.s32.totalorder %s17, 3
    %p40 = por %p38, %p39
    %p42 = scmp.ne.s32.totalorder %s25, %s41
    %p43 = scmp.eq.s32.totalorder %s17, 0
    %p44 = por %p42, %p43
    %s46 = sadd.s32 %s45, 1
    %p49 = scmp.eq.s32.totalorder %s11, 3
    %p50 = scmp.ne.s32.totalorder %s45, %s47
    %p51 = scmp.eq.s32.totalorder %s11, 0
    %p52 = por %p50, %p51
    %p53 = scmp.ne.s32.totalorder %s45, %s47
    %p54 = scmp.eq.s32.totalorder %s16, 3
    %p55 = por %p53, %p54
    %p56 = scmp.ne.s32.totalorder %s47, %s48
    %p57 = scmp.eq.s32.totalorder %s16, 0
    %p58 = por %p56, %p57
    %p59 = scmp.ne.s32.totalorder %s47, %s48
    %p60 = scmp.eq.s32.totalorder %s17, 3
    %p61 = por %p59, %p60
    %p63 = scmp.ne.s32.totalorder %s48, %s62
    %p64 = scmp.eq.s32.totalorder %s17, 0
    %p65 = por %p63, %p64
    %s67 = sadd.s32 %s66, 1
    %p70 = scmp.eq.s32.totalorder %s11, 3
    %p71 = scmp.ne.s32.totalorder %s66, %s68
    %p72 = scmp.eq.s32.totalorder %s11, 0
    %p73 = por %p71, %p72
    %p74 = scmp.ne.s32.totalorder %s66, %s68
    %p75 = scmp.eq.s32.totalorder %s16, 3
    %p76 = por %p74, %p75
    %p77 = scmp.ne.s32.totalorder %s68, %s69
    %p78 = scmp.eq.s32.totalorder %s16, 0
    %p79 = por %p77, %p78
    %p80 = scmp.ne.s32.totalorder %s68, %s69
    %p81 = scmp.eq.s32.totalorder %s17, 3
    %p82 = por %p80, %p81
    %p84 = scmp.ne.s32.totalorder %s69, %s83
    %p85 = scmp.eq.s32.totalorder %s17, 0
    %p86 = por %p84, %p85
    %s88 = sadd.s32 %s87, 1
    %p91 = scmp.eq.s32.totalorder %s11, 3
    %p92 = scmp.ne.s32.totalorder %s87, %s89
    %p93 = scmp.eq.s32.totalorder %s11, 0
    %p94 = por %p92, %p93
    %p95 = scmp.ne.s32.totalorder %s87, %s89
    %p96 = scmp.eq.s32.totalorder %s16, 3
    %p97 = por %p95, %p96
    %p98 = scmp.ne.s32.totalorder %s89, %s90
    %p99 = scmp.eq.s32.totalorder %s16, 0
    %p100 = por %p98, %p99
    %p101 = scmp.ne.s32.totalorder %s89, %s90
    %p102 = scmp.eq.s32.totalorder %s17, 3
    %p103 = por %p101, %p102
    %p105 = scmp.ne.s32.totalorder %s90, %s104
    %p106 = scmp.eq.s32.totalorder %s17, 0
    %p107 = por %p105, %p106
    %s109 = sadd.s32 %s108, 1
    %p112 = scmp.eq.s32.totalorder %s11, 3
    %p113 = scmp.ne.s32.totalorder %s108, %s110
    %p114 = scmp.eq.s32.totalorder %s11, 0
    %p115 = por %p113, %p114
    %p116 = scmp.ne.s32.totalorder %s108, %s110
    %p117 = scmp.eq.s32.totalorder %s16, 3
    %p118 = por %p116, %p117
    %p119 = scmp.ne.s32.totalorder %s110, %s111
    %p120 = scmp.eq.s32.totalorder %s16, 0
    %p121 = por %p119, %p120
    %p122 = scmp.ne.s32.totalorder %s110, %s111
    %p123 = scmp.eq.s32.totalorder %s17, 3
    %p124 = por %p122, %p123
    %p126 = scmp.ne.s32.totalorder %s111, %s125
    %p127 = scmp.eq.s32.totalorder %s17, 0
    %p128 = por %p126, %p127
    %s129 = ssub.s32 %s11, %s18
    %p130 = scmp.eq.s32.totalorder %s129, 0
    %s132 = sadd.s32 %s131, 1
    %s133 = scalar_select %p130, %s131, %s132
    %p136 = pneg %p130
    %p137 = scmp.eq.s32.totalorder %s11, 3
    %p138 = por %p136, %p137
    %p139 = scmp.ne.s32.totalorder %s131, %s134
    %p140 = scmp.eq.s32.totalorder %s11, 0
    %p141 = por %p139, %p140
    %p142 = scmp.ne.s32.totalorder %s131, %s134
    %p143 = scmp.eq.s32.totalorder %s16, 3
    %p144 = por %p142, %p143
    %p145 = scmp.ne.s32.totalorder %s134, %s135
    %p146 = scmp.eq.s32.totalorder %s16, 0
    %p147 = por %p145, %p146
    %p148 = scmp.ne.s32.totalorder %s134, %s135
    %p149 = scmp.eq.s32.totalorder %s17, 3
    %p150 = por %p148, %p149
    %p152 = scmp.ne.s32.totalorder %s135, %s151
    %p153 = scmp.eq.s32.totalorder %s17, 0
    %p154 = por %p152, %p153
    %p155 = scmp.le.s32.totalorder 1, %s11
    %p156 = scmp.lt.s32.totalorder %s11, 5
    %p157 = pnand %p155, %p156
    %p158 = pneg %p157
    // Predicated region
    $region9: #{autoencoder_forward.1} parent=5 // pred_check
      _
    $region10: #{autoencoder_forward.1} parent=5 // pred_check_branch
      %160 = sbr.rel (%p157) target = $region12
    $region11: #{autoencoder_forward.1} parent=5 // pred_region
      %s161 = ssub.s32 %s11, 1
      // Predicated region
      $region13: #{autoencoder_forward.1} parent=11 // pred_check
        %p162 = pneg %p58
      $region14: #{autoencoder_forward.1} parent=11 // pred_check_branch
        %164 = sbr.rel (%p162) target = $region16
      $region15: #{autoencoder_forward.1} parent=11 // pred_region
        _
      $region16: #{autoencoder_forward.1} parent=11 // pred_fallthru
        _
      // Predicated region
      $region17: #{autoencoder_forward.1} parent=11 // pred_check
        %p165 = pneg %p79
      $region18: #{autoencoder_forward.1} parent=11 // pred_check_branch
        %167 = sbr.rel (%p165) target = $region20
      $region19: #{autoencoder_forward.1} parent=11 // pred_region
        _
      $region20: #{autoencoder_forward.1} parent=11 // pred_fallthru
        _
      // Predicated region
      $region21: #{autoencoder_forward.1} parent=11 // pred_check
        %p168 = pneg %p100
      $region22: #{autoencoder_forward.1} parent=11 // pred_check_branch
        %170 = sbr.rel (%p168) target = $region24
      $region23: #{autoencoder_forward.1} parent=11 // pred_region
        _
      $region24: #{autoencoder_forward.1} parent=11 // pred_fallthru
        _
      // Predicated region
      $region25: #{autoencoder_forward.1} parent=11 // pred_check
        %p171 = pneg %p121
      $region26: #{autoencoder_forward.1} parent=11 // pred_check_branch
        %173 = sbr.rel (%p171) target = $region28
      $region27: #{autoencoder_forward.1} parent=11 // pred_region
        _
      $region28: #{autoencoder_forward.1} parent=11 // pred_fallthru
        _
    $region12: #{autoencoder_forward.1} parent=5 // pred_fallthru
      _
    %p174 = scmp.lt.s32.totalorder %s11, 4
    // Predicated region
    $region29: #{autoencoder_forward.1} parent=5 // pred_check
      %p175 = pneg %p174
    $region30: #{autoencoder_forward.1} parent=5 // pred_check_branch
      %177 = sbr.rel (%p175) target = $region32
    $region31: #{autoencoder_forward.1} parent=5 // pred_region
      // Predicated region
      $region33: #{autoencoder_forward.1} parent=31 // pred_check
        %p178 = pneg %p31
      $region34: #{autoencoder_forward.1} parent=31 // pred_check_branch
        %180 = sbr.rel (%p178) target = $region36
      $region35: #{autoencoder_forward.1} parent=31 // pred_region
        %s181 = smul.u32 4, %s11
        %p182 = scmp.lt.s32.totalorder %s181, 15
        %s183 = scalar_select %p182, %s181, 15
        %s184 = smul.addr %s183, 4
        %s185 = scalar_lea.vmem %s0, %s184
        %s186 = smul.u32 4, %s11
      $region36: #{autoencoder_forward.1} parent=31 // pred_fallthru
        _
    $region32: #{autoencoder_forward.1} parent=5 // pred_fallthru
      _
    %p187 = scmp.le.s32.totalorder 1, %s11
    %p188 = scmp.lt.s32.totalorder %s11, 5
    %p189 = pnand %p187, %p188
    %p190 = pneg %p189
    // Predicated region
    $region37: #{autoencoder_forward.1} parent=5 // pred_check
      _
    $region38: #{autoencoder_forward.1} parent=5 // pred_check_branch
      %192 = sbr.rel (%p189) target = $region40
    $region39: #{autoencoder_forward.1} parent=5 // pred_region
      %s193 = ssub.s32 %s11, 1
      %s194 = smul.u32 4, %s16
      %p195 = scmp.lt.s32.totalorder %s194, 15
      %s196 = scalar_select %p195, %s194, 15
      %s197 = smul.addr %s196, 4
      %s198 = scalar_lea.vmem %s0, %s197
      %p199 = pneg %p37
      %p200 = pneg %p34
      %p201 = pneg %p58
      %p202 = pneg %p55
      %p203 = pneg %p79
      %p204 = pneg %p76
      %p205 = pneg %p100
      %p206 = pneg %p97
      %p207 = pneg %p121
      %p208 = pneg %p118
      %p209 = pneg %p147
      %p210 = pneg %p144
      %s211 = smul.u32 4, %s16
      %p212 = scmp.lt.s32.totalorder %s211, 15
      %s213 = scalar_select %p212, %s211, 15
      %s214 = smul.addr %s213, 4
      %s215 = scalar_lea.vmem %s5, %s214
      %s216 = smul.u32 4, %s16
      %p217 = scmp.lt.s32.totalorder %s216, 15
      %s218 = scalar_select %p217, %s216, 15
      %s219 = smul.addr %s218, 4
      %s220 = scalar_lea.vmem %s0, %s219
      %s221 = smul.u32 4, %s16
      %s222 = smul.u32 4, %s16
      %p223 = scmp.lt.s32.totalorder %s222, 15
      %s224 = scalar_select %p223, %s222, 15
      %s225 = smul.addr %s224, 4
      %s226 = scalar_lea.vmem %s5, %s225
      %s227 = smul.u32 4, %s16
      %v229 = vld [vmem:[%s220] sm:$0xf]
      %v230 = vld [vmem:[%s220 + $0x4] sm:$0xf]
      %v231 = vld [vmem:[%s220 + $0x8] sm:$0xf]
      %v232 = vld [vmem:[%s220 + $0xc] sm:$0xf]
      %v233 = vld [vmem:[%s1] sm:$0xf]
      %v234 = vld [vmem:[%s1 + $0x4] sm:$0xf]
      %v235 = vld [vmem:[%s1 + $0x8] sm:$0xf]
      %v236 = vld [vmem:[%s1 + $0xc] sm:$0xf]
      %v237 = vld [vmem:[%s1 + $0x10] sm:$0xf]
      %v238 = vld [vmem:[%s1 + $0x14] sm:$0xf]
      %v239 = vld [vmem:[%s1 + $0x18] sm:$0xf]
      %v240 = vld [vmem:[%s1 + $0x1c] sm:$0xf]
      %v241 = vld [vmem:[%s1 + $0x20] sm:$0xf]
      %v242 = vld [vmem:[%s1 + $0x24] sm:$0xf]
      %v243 = vld [vmem:[%s1 + $0x28] sm:$0xf]
      %v244 = vld [vmem:[%s1 + $0x2c] sm:$0xf]
      %v245 = vld [vmem:[%s1 + $0x30] sm:$0xf]
      %v246 = vld [vmem:[%s1 + $0x34] sm:$0xf]
      %v247 = vld [vmem:[%s1 + $0x38] sm:$0xf]
      %v248 = vld [vmem:[%s1 + $0x3c] sm:$0xf]
      %v249 = vld [vmem:[%s2] sm:$0x1]
      %v251 = vlaneseq
      %v252 = vshrl.u32 %v251, 7
      %v253 = vsub.s32 0, %v252
      %v254 = vrot.slane %v249, %v253
      %v260 = vunpack.c.l.b16 %v229
      %v261 = vunpack.c.l.b16 %v230
      %v262 = vunpack.c.l.b16 %v231
      %v263 = vunpack.c.l.b16 %v232
      %v264 = vpack.c.b16 %v261, %v260
      %v265 = vpack.c.b16 %v263, %v262
      %v284 = vunpack.c.l.b16 %v233
      %v285 = vunpack.c.l.b16 %v234
      %v286 = vunpack.c.l.b16 %v235
      %v287 = vunpack.c.l.b16 %v236
      %v288 = vunpack.c.l.b16 %v237
      %v289 = vunpack.c.l.b16 %v238
      %v290 = vunpack.c.l.b16 %v239
      %v291 = vunpack.c.l.b16 %v240
      %v292 = vunpack.c.l.b16 %v241
      %v293 = vunpack.c.l.b16 %v242
      %v294 = vunpack.c.l.b16 %v243
      %v295 = vunpack.c.l.b16 %v244
      %v296 = vunpack.c.l.b16 %v245
      %v297 = vunpack.c.l.b16 %v246
      %v298 = vunpack.c.l.b16 %v247
      %v299 = vunpack.c.l.b16 %v248
      %v300 = vpack.c.b16 %v285, %v284
      %v301 = vpack.c.b16 %v287, %v286
      %v302 = vpack.c.b16 %v289, %v288
      %v303 = vpack.c.b16 %v291, %v290
      %v304 = vpack.c.b16 %v293, %v292
      %v305 = vpack.c.b16 %v295, %v294
      %v306 = vpack.c.b16 %v297, %v296
      %v307 = vpack.c.b16 %v299, %v298
      %316 = vmatprep.subr.bf16.mxu0 0
      %317 = vmatpush1.bf16.msra.mxu0 %v300
      %318 = vmatprep.subr.bf16.mxu0 0
      %319 = vmatpush1.bf16.msra.mxu0 %v301
      %320 = vmatprep.subr.bf16.mxu0 0
      %321 = vmatpush1.bf16.msra.mxu0 %v302
      %322 = vmatprep.subr.bf16.mxu0 0
      %323 = vmatpush1.bf16.msra.mxu0 %v303
      %324 = vmatprep.subr.bf16.mxu0 0
      %325 = vmatpush1.bf16.msra.mxu0 %v304
      %326 = vmatprep.subr.bf16.mxu0 0
      %327 = vmatpush1.bf16.msra.mxu0 %v305
      %328 = vmatprep.subr.bf16.mxu0 0
      %329 = vmatpush1.bf16.msra.mxu0 %v306
      %330 = vmatprep.subr.bf16.mxu0 0
      %331 = vmatpush1.bf16.msra.mxu0 %v307
      %332 = vmatprep.subr.bf16.mxu0 0
      %333 = vmatpush1.bf16.msra.mxu0 0
      %334 = vmatprep.subr.bf16.mxu0 0
      %335 = vmatpush1.bf16.msra.mxu0 0
      %336 = vmatprep.subr.bf16.mxu0 0
      %337 = vmatpush1.bf16.msra.mxu0 0
      %338 = vmatprep.subr.bf16.mxu0 0
      %339 = vmatpush1.bf16.msra.mxu0 0
      %340 = vmatprep.subr.bf16.mxu0 0
      %341 = vmatpush1.bf16.msra.mxu0 0
      %342 = vmatprep.subr.bf16.mxu0 0
      %343 = vmatpush1.bf16.msra.mxu0 0
      %344 = vmatprep.subr.bf16.mxu0 0
      %345 = vmatpush1.bf16.msra.mxu0 0
      %346 = vmatprep.subr.bf16.mxu0 0
      %347 = vmatpush1.bf16.msra.mxu0 0
      %348 = vmatprep.mubr.bf16.mxu0 0
      %349 = vmatmul.mubr.bf16.gmra.mrb[0].mxu0 %v264
      %v350 = vpop.f32.mrb[0].mxu0
      %v351 = vadd.f32 %v254, %v350
      %v352 = vpop.f32.mrb[0].mxu0
      %v353 = vpop.f32.mrb[0].mxu0
      %v354 = vadd.f32 %v254, %v353
      %v355 = vpop.f32.mrb[0].mxu0
      %356 = vmatprep.mubr.bf16.mxu0 0
      %357 = vmatmul.mubr.bf16.gmra.mrb[0].mxu0 %v265
      %v358 = vpop.f32.mrb[0].mxu0
      %v359 = vadd.f32 %v254, %v358
      %v360 = vpop.f32.mrb[0].mxu0
      %v361 = vpop.f32.mrb[0].mxu0
      %v362 = vadd.f32 %v254, %v361
      %v363 = vpop.f32.mrb[0].mxu0
      %364 = vdwg.mxu0
      %v365 = vmax.f32 %v351, 0.0
      %v366 = vmax.f32 %v354, 0.0
      %v367 = vmax.f32 %v359, 0.0
      %v368 = vmax.f32 %v362, 0.0
      %v369 = vpack.c.bf16 %v366, %v365
      %v370 = vpack.c.bf16 %v368, %v367
      %v371 = vld [vmem:[%s3] sm:$0xf]
      %v372 = vld [vmem:[%s3 + $0x4] sm:$0xf]
      %v373 = vld [vmem:[%s3 + $0x8] sm:$0xf]
      %v374 = vld [vmem:[%s3 + $0xc] sm:$0xf]
      %v375 = vld [vmem:[%s3 + $0x10] sm:$0xf]
      %v376 = vld [vmem:[%s3 + $0x14] sm:$0xf]
      %v377 = vld [vmem:[%s3 + $0x18] sm:$0xf]
      %v378 = vld [vmem:[%s3 + $0x1c] sm:$0xf]
      %v379 = vld [vmem:[%s3 + $0x20] sm:$0xf]
      %v380 = vld [vmem:[%s3 + $0x24] sm:$0xf]
      %v381 = vld [vmem:[%s3 + $0x28] sm:$0xf]
      %v382 = vld [vmem:[%s3 + $0x2c] sm:$0xf]
      %v383 = vld [vmem:[%s3 + $0x30] sm:$0xf]
      %v384 = vld [vmem:[%s3 + $0x34] sm:$0xf]
      %v385 = vld [vmem:[%s3 + $0x38] sm:$0xf]
      %v386 = vld [vmem:[%s3 + $0x3c] sm:$0xf]
      %v387 = vld [vmem:[%s4] sm:$0x1]
      %v389 = vlaneseq
      %v390 = vshrl.u32 %v389, 7
      %v391 = vsub.s32 0, %v390
      %v392 = vrot.slane %v387, %v391
      %v410 = vunpack.c.l.b16 %v371
      %v411 = vunpack.c.l.b16 %v372
      %v412 = vunpack.c.l.b16 %v373
      %v413 = vunpack.c.l.b16 %v374
      %v414 = vunpack.c.l.b16 %v375
      %v415 = vunpack.c.l.b16 %v376
      %v416 = vunpack.c.l.b16 %v377
      %v417 = vunpack.c.l.b16 %v378
      %v418 = vunpack.c.l.b16 %v379
      %v419 = vunpack.c.l.b16 %v380
      %v420 = vunpack.c.l.b16 %v381
      %v421 = vunpack.c.l.b16 %v382
      %v422 = vunpack.c.l.b16 %v383
      %v423 = vunpack.c.l.b16 %v384
      %v424 = vunpack.c.l.b16 %v385
      %v425 = vunpack.c.l.b16 %v386
      %v426 = vpack.c.b16 %v411, %v410
      %v427 = vpack.c.b16 %v413, %v412
      %v428 = vpack.c.b16 %v415, %v414
      %v429 = vpack.c.b16 %v417, %v416
      %v430 = vpack.c.b16 %v419, %v418
      %v431 = vpack.c.b16 %v421, %v420
      %v432 = vpack.c.b16 %v423, %v422
      %v433 = vpack.c.b16 %v425, %v424
      %442 = vmatprep.subr.bf16.mxu0 0
      %443 = vmatpush1.bf16.msra.mxu0 %v426
      %444 = vmatprep.subr.bf16.mxu0 0
      %445 = vmatpush1.bf16.msra.mxu0 %v427
      %446 = vmatprep.subr.bf16.mxu0 0
      %447 = vmatpush1.bf16.msra.mxu0 %v428
      %448 = vmatprep.subr.bf16.mxu0 0
      %449 = vmatpush1.bf16.msra.mxu0 %v429
      %450 = vmatprep.subr.bf16.mxu0 0
      %451 = vmatpush1.bf16.msra.mxu0 %v430
      %452 = vmatprep.subr.bf16.mxu0 0
      %453 = vmatpush1.bf16.msra.mxu0 %v431
      %454 = vmatprep.subr.bf16.mxu0 0
      %455 = vmatpush1.bf16.msra.mxu0 %v432
      %456 = vmatprep.subr.bf16.mxu0 0
      %457 = vmatpush1.bf16.msra.mxu0 %v433
      %458 = vmatprep.subr.bf16.mxu0 0
      %459 = vmatpush1.bf16.msra.mxu0 0
      %460 = vmatprep.subr.bf16.mxu0 0
      %461 = vmatpush1.bf16.msra.mxu0 0
      %462 = vmatprep.subr.bf16.mxu0 0
      %463 = vmatpush1.bf16.msra.mxu0 0
      %464 = vmatprep.subr.bf16.mxu0 0
      %465 = vmatpush1.bf16.msra.mxu0 0
      %466 = vmatprep.subr.bf16.mxu0 0
      %467 = vmatpush1.bf16.msra.mxu0 0
      %468 = vmatprep.subr.bf16.mxu0 0
      %469 = vmatpush1.bf16.msra.mxu0 0
      %470 = vmatprep.subr.bf16.mxu0 0
      %471 = vmatpush1.bf16.msra.mxu0 0
      %472 = vmatprep.subr.bf16.mxu0 0
      %473 = vmatpush1.bf16.msra.mxu0 0
      %474 = vmatprep.mubr.bf16.mxu0 0
      %475 = vmatmul.mubr.bf16.gmra.mrb[0].mxu0 %v369
      %v476 = vpop.f32.mrb[0].mxu0
      %v477 = vadd.f32 %v392, %v476
      %v478 = vpop.f32.mrb[0].mxu0
      %v479 = vpop.f32.mrb[0].mxu0
      %v480 = vadd.f32 %v392, %v479
      %v481 = vpop.f32.mrb[0].mxu0
      %482 = vmatprep.mubr.bf16.mxu0 0
      %483 = vmatmul.mubr.bf16.gmra.mrb[0].mxu0 %v370
      %v484 = vpop.f32.mrb[0].mxu0
      %v485 = vadd.f32 %v392, %v484
      %v486 = vpop.f32.mrb[0].mxu0
      %v487 = vpop.f32.mrb[0].mxu0
      %v488 = vadd.f32 %v392, %v487
      %v489 = vpop.f32.mrb[0].mxu0
      %490 = vdwg.mxu0
      %v491 = vxor.u32 %v477, 2147483648
      %v492 = vxor.u32 %v480, 2147483648
      %v493 = vxor.u32 %v485, 2147483648
      %v494 = vxor.u32 %v488, 2147483648
      %v495 = vmul.f32 %v491, 1.442695
      %v496 = vpow.pop %v495
      %v497 = vmul.f32 %v492, 1.442695
      %v498 = vpow.pop %v497
      %v499 = vmul.f32 %v493, 1.442695
      %v500 = vpow.pop %v499
      %v501 = vmul.f32 %v494, 1.442695
      %v502 = vpow.pop %v501
      %v503 = vadd.f32 %v496, 1.0
      %v504 = vadd.f32 %v498, 1.0
      %v505 = vadd.f32 %v500, 1.0
      %v506 = vadd.f32 %v502, 1.0
      %v507 = vrcp.pop %v503
      %v508 = vmul.f32 1.0, %v507
      %v509 = vrcp.pop %v504
      %v510 = vmul.f32 1.0, %v509
      %v511 = vrcp.pop %v505
      %v512 = vmul.f32 1.0, %v511
      %v513 = vrcp.pop %v506
      %v514 = vmul.f32 1.0, %v513
      %v515 = vpack.c.bf16 %v510, %v508
      %v516 = vpack.c.bf16 %v514, %v512
      %v519 = vunpack.c.l.b16 %v515
      %v520 = vunpack.c.h.b16 %v515
      %v521 = vunpack.c.l.b16 %v516
      %v522 = vunpack.c.h.b16 %v516
      %v523 = vpack.c.b16 %v519, %v519
      %v524 = vpack.c.b16 %v520, %v520
      %v525 = vpack.c.b16 %v521, %v521
      %v526 = vpack.c.b16 %v522, %v522
      %531 = vst [vmem:[%s226] sm:$0xf] %v523
      %532 = vst [vmem:[%s226 + $0x4] sm:$0xf] %v524
      %533 = vst [vmem:[%s226 + $0x8] sm:$0xf] %v525
      %534 = vst [vmem:[%s226 + $0xc] sm:$0xf] %v526
      %s535 = smul.u32 4, %s16
      %p536 = scmp.lt.s32.totalorder %s535, 15
      %s537 = scalar_select %p536, %s535, 15
      %s538 = smul.addr %s537, 4
      %s539 = scalar_lea.vmem %s5, %s538
      // Predicated region
      $region41: #{autoencoder_forward.1} parent=39 // pred_check
        %p540 = pneg %p144
      $region42: #{autoencoder_forward.1} parent=39 // pred_check_branch
        %542 = sbr.rel (%p540) target = $region44
      $region43: #{autoencoder_forward.1} parent=39 // pred_region
        %s543 = smul.u32 4, %s16
      $region44: #{autoencoder_forward.1} parent=39 // pred_fallthru
        _
    $region40: #{autoencoder_forward.1} parent=5 // pred_fallthru
      _
    %p544 = scmp.le.s32.totalorder 2, %s11
    // Predicated region
    $region45: #{autoencoder_forward.1} parent=5 // pred_check
      %p545 = pneg %p544
    $region46: #{autoencoder_forward.1} parent=5 // pred_check_branch
      %547 = sbr.rel (%p545) target = $region48
    $region47: #{autoencoder_forward.1} parent=5 // pred_region
      %s548 = ssub.s32 %s11, 2
      // Predicated region
      $region49: #{autoencoder_forward.1} parent=47 // pred_check
        %p549 = pneg %p150
      $region50: #{autoencoder_forward.1} parent=47 // pred_check_branch
        %551 = sbr.rel (%p549) target = $region52
      $region51: #{autoencoder_forward.1} parent=47 // pred_region
        %s552 = smul.u32 4, %s17
        %p553 = scmp.lt.s32.totalorder %s552, 15
        %s554 = scalar_select %p553, %s552, 15
        %s555 = smul.addr %s554, 4
        %s556 = scalar_lea.vmem %s5, %s555
      $region52: #{autoencoder_forward.1} parent=47 // pred_fallthru
        _
    $region48: #{autoencoder_forward.1} parent=5 // pred_fallthru
      _
  $region6: #{autoencoder_forward.1} parent=0 // loop_footer
    %s15 = sadd.s32 1, %s11
  $region7: #{autoencoder_forward.1} parent=0 // loop_footer_branch
    %10 = sbr.rel target = $region3
  $region8: #{autoencoder_forward.1} parent=0 // loop_exit
    _

// kernel: autoencoder_forward.1
$region0: #{autoencoder_forward.1}
  #allocation0 [shape = 'u32[]', space=smem, size = 0x4, offset = 0x4, fixed_abs, tag = 'smem constant byte address 0x4 - core index']
  #allocation1 [shape = 'u32[144,128]{1,0:T(1,128)}', space=vmem, size = 0x12000, scoped, tag = 'internal scratch']
  %s0 = inlined_call_operand.vmem [shape: bf16[128,128], index: 0, kind: input, shape index: {}]
  %s1 = inlined_call_operand.vmem [shape: bf16[128,128], index: 1, kind: input, shape index: {}]
  %s2 = inlined_call_operand.vmem [shape: f32[1,128], index: 2, kind: input, shape index: {}]
  %s3 = inlined_call_operand.vmem [shape: bf16[128,128], index: 3, kind: input, shape index: {}]
  %s4 = inlined_call_operand.vmem [shape: f32[1,128], index: 4, kind: input, shape index: {}]
  %s5 = inlined_call_operand.vmem [shape: bf16[128,128], index: 5, kind: output, shape index: {}]
  %s6 = sld [smem:[#allocation0]]
  $region53: #{autoencoder_forward.1} parent=0
    _
  %s8 = ssub.s32 1, %s6
  %s9 = scalar_select 0, %s8, %s6
  loop: start=0, step=1, limit=6
  $region2: #{autoencoder_forward.1} parent=0 // loop_pre_header
    _
  $region3: #{autoencoder_forward.1} parent=0 // loop_header
    %s11 = sphi 0, %s15
    %p12 = scmp.ge.s32.totalorder %s11, 6
    %s21 = sphi 0, %s23
    %s24 = sphi 0, %s21
    %s25 = sphi 0, %s24
    %s41 = sphi 0, %s25
    %s45 = sphi 0, %s45
    %s47 = sphi 0, %s45
    %s48 = sphi 0, %s47
    %s62 = sphi 0, %s48
    %s66 = sphi 0, %s66
    %s68 = sphi 0, %s66
    %s69 = sphi 0, %s68
    %s83 = sphi 0, %s69
    %s87 = sphi 0, %s87
    %s89 = sphi 0, %s87
    %s90 = sphi 0, %s89
    %s104 = sphi 0, %s90
    %s108 = sphi 0, %s108
    %s110 = sphi 0, %s108
    %s111 = sphi 0, %s110
    %s125 = sphi 0, %s111
    %s131 = sphi 0, %s133
    %s134 = sphi 0, %s131
    %s135 = sphi 0, %s134
    %s151 = sphi 0, %s135
  $region4: #{autoencoder_forward.1} parent=0 // loop_header_branch
    %14 = sbr.rel (%p12) target = $region8
  $region5: #{autoencoder_forward.1} parent=0 // loop_body
    %s16 = ssub.s32 %s11, 1
    %s17 = ssub.s32 %s11, 2
    %s18 = sadd.s32 %s11, 1
    %s19 = ssub.s32 %s11, %s18
    %p20 = scmp.eq.s32.totalorder %s19, 0
    %s22 = sadd.s32 %s21, 1
    %s23 = scalar_select %p20, %s21, %s22
    %p26 = pneg %p20
    %p27 = scmp.eq.s32.totalorder %s11, 3
    %p28 = por %p26, %p27
    %p29 = scmp.ne.s32.totalorder %s21, %s24
    %p30 = scmp.eq.s32.totalorder %s11, 0
    %p31 = por %p29, %p30
    %p32 = scmp.ne.s32.totalorder %s21, %s24
    %p33 = scmp.eq.s32.totalorder %s16, 3
    %p34 = por %p32, %p33
    %p35 = scmp.ne.s32.totalorder %s24, %s25
    %p36 = scmp.eq.s32.totalorder %s16, 0
    %p37 = por %p35, %p36
    %p38 = scmp.ne.s32.totalorder %s24, %s25
    %p39 = scmp.eq.s32.totalorder %s17, 3
    %p40 = por %p38, %p39
    %p42 = scmp.ne.s32.totalorder %s25, %s41
    %p43 = scmp.eq.s32.totalorder %s17, 0
    %p44 = por %p42, %p43
    %s46 = sadd.s32 %s45, 1
    %p49 = scmp.eq.s32.totalorder %s11, 3
    %p50 = scmp.ne.s32.totalorder %s45, %s47
    %p51 = scmp.eq.s32.totalorder %s11, 0
    %p52 = por %p50, %p51
    %p53 = scmp.ne.s32.totalorder %s45, %s47
    %p54 = scmp.eq.s32.totalorder %s16, 3
    %p55 = por %p53, %p54
    %p56 = scmp.ne.s32.totalorder %s47, %s48
    %p57 = scmp.eq.s32.totalorder %s16, 0
    %p58 = por %p56, %p57
    %p59 = scmp.ne.s32.totalorder %s47, %s48
    %p60 = scmp.eq.s32.totalorder %s17, 3
    %p61 = por %p59, %p60
    %p63 = scmp.ne.s32.totalorder %s48, %s62
    %p64 = scmp.eq.s32.totalorder %s17, 0
    %p65 = por %p63, %p64
    %s67 = sadd.s32 %s66, 1
    %p70 = scmp.eq.s32.totalorder %s11, 3
    %p71 = scmp.ne.s32.totalorder %s66, %s68
    %p72 = scmp.eq.s32.totalorder %s11, 0
    %p73 = por %p71, %p72
    %p74 = scmp.ne.s32.totalorder %s66, %s68
    %p75 = scmp.eq.s32.totalorder %s16, 3
    %p76 = por %p74, %p75
    %p77 = scmp.ne.s32.totalorder %s68, %s69
    %p78 = scmp.eq.s32.totalorder %s16, 0
    %p79 = por %p77, %p78
    %p80 = scmp.ne.s32.totalorder %s68, %s69
    %p81 = scmp.eq.s32.totalorder %s17, 3
    %p82 = por %p80, %p81
    %p84 = scmp.ne.s32.totalorder %s69, %s83
    %p85 = scmp.eq.s32.totalorder %s17, 0
    %p86 = por %p84, %p85
    %s88 = sadd.s32 %s87, 1
    %p91 = scmp.eq.s32.totalorder %s11, 3
    %p92 = scmp.ne.s32.totalorder %s87, %s89
    %p93 = scmp.eq.s32.totalorder %s11, 0
    %p94 = por %p92, %p93
    %p95 = scmp.ne.s32.totalorder %s87, %s89
    %p96 = scmp.eq.s32.totalorder %s16, 3
    %p97 = por %p95, %p96
    %p98 = scmp.ne.s32.totalorder %s89, %s90
    %p99 = scmp.eq.s32.totalorder %s16, 0
    %p100 = por %p98, %p99
    %p101 = scmp.ne.s32.totalorder %s89, %s90
    %p102 = scmp.eq.s32.totalorder %s17, 3
    %p103 = por %p101, %p102
    %p105 = scmp.ne.s32.totalorder %s90, %s104
    %p106 = scmp.eq.s32.totalorder %s17, 0
    %p107 = por %p105, %p106
    %s109 = sadd.s32 %s108, 1
    %p112 = scmp.eq.s32.totalorder %s11, 3
    %p113 = scmp.ne.s32.totalorder %s108, %s110
    %p114 = scmp.eq.s32.totalorder %s11, 0
    %p115 = por %p113, %p114
    %p116 = scmp.ne.s32.totalorder %s108, %s110
    %p117 = scmp.eq.s32.totalorder %s16, 3
    %p118 = por %p116, %p117
    %p119 = scmp.ne.s32.totalorder %s110, %s111
    %p120 = scmp.eq.s32.totalorder %s16, 0
    %p121 = por %p119, %p120
    %p122 = scmp.ne.s32.totalorder %s110, %s111
    %p123 = scmp.eq.s32.totalorder %s17, 3
    %p124 = por %p122, %p123
    %p126 = scmp.ne.s32.totalorder %s111, %s125
    %p127 = scmp.eq.s32.totalorder %s17, 0
    %p128 = por %p126, %p127
    %s129 = ssub.s32 %s11, %s18
    %p130 = scmp.eq.s32.totalorder %s129, 0
    %s132 = sadd.s32 %s131, 1
    %s133 = scalar_select %p130, %s131, %s132
    %p136 = pneg %p130
    %p137 = scmp.eq.s32.totalorder %s11, 3
    %p138 = por %p136, %p137
    %p139 = scmp.ne.s32.totalorder %s131, %s134
    %p140 = scmp.eq.s32.totalorder %s11, 0
    %p141 = por %p139, %p140
    %p142 = scmp.ne.s32.totalorder %s131, %s134
    %p143 = scmp.eq.s32.totalorder %s16, 3
    %p144 = por %p142, %p143
    %p145 = scmp.ne.s32.totalorder %s134, %s135
    %p146 = scmp.eq.s32.totalorder %s16, 0
    %p147 = por %p145, %p146
    %p148 = scmp.ne.s32.totalorder %s134, %s135
    %p149 = scmp.eq.s32.totalorder %s17, 3
    %p150 = por %p148, %p149
    %p152 = scmp.ne.s32.totalorder %s135, %s151
    %p153 = scmp.eq.s32.totalorder %s17, 0
    %p154 = por %p152, %p153
    %p155 = scmp.le.s32.totalorder 1, %s11
    %p156 = scmp.lt.s32.totalorder %s11, 5
    %p157 = pnand %p155, %p156
    %p158 = pneg %p157
    // Predicated region
    $region9: #{autoencoder_forward.1} parent=5 // pred_check
      _
    $region10: #{autoencoder_forward.1} parent=5 // pred_check_branch
      %160 = sbr.rel (%p157) target = $region12
    $region11: #{autoencoder_forward.1} parent=5 // pred_region
      %s161 = ssub.s32 %s11, 1
      // Predicated region
      $region13: #{autoencoder_forward.1} parent=11 // pred_check
        %p162 = pneg %p58
      $region14: #{autoencoder_forward.1} parent=11 // pred_check_branch
        %164 = sbr.rel (%p162) target = $region16
      $region15: #{autoencoder_forward.1} parent=11 // pred_region
        _
      $region16: #{autoencoder_forward.1} parent=11 // pred_fallthru
        _
      // Predicated region
      $region17: #{autoencoder_forward.1} parent=11 // pred_check
        %p165 = pneg %p79
      $region18: #{autoencoder_forward.1} parent=11 // pred_check_branch
        %167 = sbr.rel (%p165) target = $region20
      $region19: #{autoencoder_forward.1} parent=11 // pred_region
        _
      $region20: #{autoencoder_forward.1} parent=11 // pred_fallthru
        _
      // Predicated region
      $region21: #{autoencoder_forward.1} parent=11 // pred_check
        %p168 = pneg %p100
      $region22: #{autoencoder_forward.1} parent=11 // pred_check_branch
        %170 = sbr.rel (%p168) target = $region24
      $region23: #{autoencoder_forward.1} parent=11 // pred_region
        _
      $region24: #{autoencoder_forward.1} parent=11 // pred_fallthru
        _
      // Predicated region
      $region25: #{autoencoder_forward.1} parent=11 // pred_check
        %p171 = pneg %p121
      $region26: #{autoencoder_forward.1} parent=11 // pred_check_branch
        %173 = sbr.rel (%p171) target = $region28
      $region27: #{autoencoder_forward.1} parent=11 // pred_region
        _
      $region28: #{autoencoder_forward.1} parent=11 // pred_fallthru
        _
    $region12: #{autoencoder_forward.1} parent=5 // pred_fallthru
      _
    %p174 = scmp.lt.s32.totalorder %s11, 4
    // Predicated region
    $region29: #{autoencoder_forward.1} parent=5 // pred_check
      %p175 = pneg %p174
    $region30: #{autoencoder_forward.1} parent=5 // pred_check_branch
      %177 = sbr.rel (%p175) target = $region32
    $region31: #{autoencoder_forward.1} parent=5 // pred_region
      // Predicated region
      $region33: #{autoencoder_forward.1} parent=31 // pred_check
        %p178 = pneg %p31
      $region34: #{autoencoder_forward.1} parent=31 // pred_check_branch
        %180 = sbr.rel (%p178) target = $region36
      $region35: #{autoencoder_forward.1} parent=31 // pred_region
        %s181 = smul.u32 4, %s11
        %p182 = scmp.lt.s32.totalorder %s181, 15
        %s183 = scalar_select %p182, %s181, 15
        %s184 = smul.addr %s183, 4
        %s185 = scalar_lea.vmem %s0, %s184
        %s186 = smul.u32 4, %s11
      $region36: #{autoencoder_forward.1} parent=31 // pred_fallthru
        _
    $region32: #{autoencoder_forward.1} parent=5 // pred_fallthru
      _
    %p187 = scmp.le.s32.totalorder 1, %s11
    %p188 = scmp.lt.s32.totalorder %s11, 5
    %p189 = pnand %p187, %p188
    %p190 = pneg %p189
    // Predicated region
    $region37: #{autoencoder_forward.1} parent=5 // pred_check
      _
    $region38: #{autoencoder_forward.1} parent=5 // pred_check_branch
      %192 = sbr.rel (%p189) target = $region40
    $region39: #{autoencoder_forward.1} parent=5 // pred_region
      %s193 = ssub.s32 %s11, 1
      %s194 = smul.u32 4, %s16
      %p195 = scmp.lt.s32.totalorder %s194, 15
      %s196 = scalar_select %p195, %s194, 15
      %s197 = smul.addr %s196, 4
      %s198 = scalar_lea.vmem %s0, %s197
      %p199 = pneg %p37
      %p200 = pneg %p34
      %p201 = pneg %p58
      %p202 = pneg %p55
      %p203 = pneg %p79
      %p204 = pneg %p76
      %p205 = pneg %p100
      %p206 = pneg %p97
      %p207 = pneg %p121
      %p208 = pneg %p118
      %p209 = pneg %p147
      %p210 = pneg %p144
      %s211 = smul.u32 4, %s16
      %p212 = scmp.lt.s32.totalorder %s211, 15
      %s213 = scalar_select %p212, %s211, 15
      %s214 = smul.addr %s213, 4
      %s215 = scalar_lea.vmem %s5, %s214
      %s216 = smul.u32 4, %s16
      %p217 = scmp.lt.s32.totalorder %s216, 15
      %s218 = scalar_select %p217, %s216, 15
      %s219 = smul.addr %s218, 4
      %s220 = scalar_lea.vmem %s0, %s219
      %s221 = smul.u32 4, %s16
      %s222 = smul.u32 4, %s16
      %p223 = scmp.lt.s32.totalorder %s222, 15
      %s224 = scalar_select %p223, %s222, 15
      %s225 = smul.addr %s224, 4
      %s226 = scalar_lea.vmem %s5, %s225
      %s227 = smul.u32 4, %s16
      %v229 = vld [vmem:[%s220] sm:$0xf]
      %v230 = vld [vmem:[%s220 + $0x4] sm:$0xf]
      %v231 = vld [vmem:[%s220 + $0x8] sm:$0xf]
      %v232 = vld [vmem:[%s220 + $0xc] sm:$0xf]
      %v233 = vld [vmem:[%s1] sm:$0xf]
      %v234 = vld [vmem:[%s1 + $0x4] sm:$0xf]
      %v235 = vld [vmem:[%s1 + $0x8] sm:$0xf]
      %v236 = vld [vmem:[%s1 + $0xc] sm:$0xf]
      %v237 = vld [vmem:[%s1 + $0x10] sm:$0xf]
      %v238 = vld [vmem:[%s1 + $0x14] sm:$0xf]
      %v239 = vld [vmem:[%s1 + $0x18] sm:$0xf]
      %v240 = vld [vmem:[%s1 + $0x1c] sm:$0xf]
      %v241 = vld [vmem:[%s1 + $0x20] sm:$0xf]
      %v242 = vld [vmem:[%s1 + $0x24] sm:$0xf]
      %v243 = vld [vmem:[%s1 + $0x28] sm:$0xf]
      %v244 = vld [vmem:[%s1 + $0x2c] sm:$0xf]
      %v245 = vld [vmem:[%s1 + $0x30] sm:$0xf]
      %v246 = vld [vmem:[%s1 + $0x34] sm:$0xf]
      %v247 = vld [vmem:[%s1 + $0x38] sm:$0xf]
      %v248 = vld [vmem:[%s1 + $0x3c] sm:$0xf]
      %v249 = vld [vmem:[%s2] sm:$0x1]
      %v251 = vlaneseq
      %v252 = vshrl.u32 %v251, 7
      %v253 = vsub.s32 0, %v252
      %v254 = vrot.slane %v249, %v253
      %v260 = vunpack.c.l.b16 %v229
      %v261 = vunpack.c.l.b16 %v230
      %v262 = vunpack.c.l.b16 %v231
      %v263 = vunpack.c.l.b16 %v232
      %v264 = vpack.c.b16 %v261, %v260
      %v265 = vpack.c.b16 %v263, %v262
      %v284 = vunpack.c.l.b16 %v233
      %v285 = vunpack.c.l.b16 %v234
      %v286 = vunpack.c.l.b16 %v235
      %v287 = vunpack.c.l.b16 %v236
      %v288 = vunpack.c.l.b16 %v237
      %v289 = vunpack.c.l.b16 %v238
      %v290 = vunpack.c.l.b16 %v239
      %v291 = vunpack.c.l.b16 %v240
      %v292 = vunpack.c.l.b16 %v241
      %v293 = vunpack.c.l.b16 %v242
      %v294 = vunpack.c.l.b16 %v243
      %v295 = vunpack.c.l.b16 %v244
      %v296 = vunpack.c.l.b16 %v245
      %v297 = vunpack.c.l.b16 %v246
      %v298 = vunpack.c.l.b16 %v247
      %v299 = vunpack.c.l.b16 %v248
      %v300 = vpack.c.b16 %v285, %v284
      %v301 = vpack.c.b16 %v287, %v286
      %v302 = vpack.c.b16 %v289, %v288
      %v303 = vpack.c.b16 %v291, %v290
      %v304 = vpack.c.b16 %v293, %v292
      %v305 = vpack.c.b16 %v295, %v294
      %v306 = vpack.c.b16 %v297, %v296
      %v307 = vpack.c.b16 %v299, %v298
      %316 = vmatprep.subr.bf16.mxu0 0
      %317 = vmatpush1.bf16.msra.mxu0 %v300
      %318 = vmatprep.subr.bf16.mxu0 0
      %319 = vmatpush1.bf16.msra.mxu0 %v301
      %320 = vmatprep.subr.bf16.mxu0 0
      %321 = vmatpush1.bf16.msra.mxu0 %v302
      %322 = vmatprep.subr.bf16.mxu0 0
      %323 = vmatpush1.bf16.msra.mxu0 %v303
      %324 = vmatprep.subr.bf16.mxu0 0
      %325 = vmatpush1.bf16.msra.mxu0 %v304
      %326 = vmatprep.subr.bf16.mxu0 0
      %327 = vmatpush1.bf16.msra.mxu0 %v305
      %328 = vmatprep.subr.bf16.mxu0 0
      %329 = vmatpush1.bf16.msra.mxu0 %v306
      %330 = vmatprep.subr.bf16.mxu0 0
      %331 = vmatpush1.bf16.msra.mxu0 %v307
      %332 = vmatprep.subr.bf16.mxu0 0
      %333 = vmatpush1.bf16.msra.mxu0 0
      %334 = vmatprep.subr.bf16.mxu0 0
      %335 = vmatpush1.bf16.msra.mxu0 0
      %336 = vmatprep.subr.bf16.mxu0 0
      %337 = vmatpush1.bf16.msra.mxu0 0
      %338 = vmatprep.subr.bf16.mxu0 0
      %339 = vmatpush1.bf16.msra.mxu0 0
      %340 = vmatprep.subr.bf16.mxu0 0
      %341 = vmatpush1.bf16.msra.mxu0 0
      %342 = vmatprep.subr.bf16.mxu0 0
      %343 = vmatpush1.bf16.msra.mxu0 0
      %344 = vmatprep.subr.bf16.mxu0 0
      %345 = vmatpush1.bf16.msra.mxu0 0
      %346 = vmatprep.subr.bf16.mxu0 0
      %347 = vmatpush1.bf16.msra.mxu0 0
      %348 = vmatprep.mubr.bf16.mxu0 0
      %349 = vmatmul.mubr.bf16.gmra.mrb[0].mxu0 %v264
      %v350 = vpop.f32.mrb[0].mxu0
      %v351 = vadd.f32 %v254, %v350
      %v352 = vpop.f32.mrb[0].mxu0
      %v353 = vpop.f32.mrb[0].mxu0
      %v354 = vadd.f32 %v254, %v353
      %v355 = vpop.f32.mrb[0].mxu0
      %356 = vmatprep.mubr.bf16.mxu0 0
      %357 = vmatmul.mubr.bf16.gmra.mrb[0].mxu0 %v265
      %v358 = vpop.f32.mrb[0].mxu0
      %v359 = vadd.f32 %v254, %v358
      %v360 = vpop.f32.mrb[0].mxu0
      %v361 = vpop.f32.mrb[0].mxu0
      %v362 = vadd.f32 %v254, %v361
      %v363 = vpop.f32.mrb[0].mxu0
      %364 = vdwg.mxu0
      %v365 = vmax.f32 %v351, 0.0
      %v366 = vmax.f32 %v354, 0.0
      %v367 = vmax.f32 %v359, 0.0
      %v368 = vmax.f32 %v362, 0.0
      %v369 = vpack.c.bf16 %v366, %v365
      %v370 = vpack.c.bf16 %v368, %v367
      %v371 = vld [vmem:[%s3] sm:$0xf]
      %v372 = vld [vmem:[%s3 + $0x4] sm:$0xf]
      %v373 = vld [vmem:[%s3 + $0x8] sm:$0xf]
      %v374 = vld [vmem:[%s3 + $0xc] sm:$0xf]
      %v375 = vld [vmem:[%s3 + $0x10] sm:$0xf]
      %v376 = vld [vmem:[%s3 + $0x14] sm:$0xf]
      %v377 = vld [vmem:[%s3 + $0x18] sm:$0xf]
      %v378 = vld [vmem:[%s3 + $0x1c] sm:$0xf]
      %v379 = vld [vmem:[%s3 + $0x20] sm:$0xf]
      %v380 = vld [vmem:[%s3 + $0x24] sm:$0xf]
      %v381 = vld [vmem:[%s3 + $0x28] sm:$0xf]
      %v382 = vld [vmem:[%s3 + $0x2c] sm:$0xf]
      %v383 = vld [vmem:[%s3 + $0x30] sm:$0xf]
      %v384 = vld [vmem:[%s3 + $0x34] sm:$0xf]
      %v385 = vld [vmem:[%s3 + $0x38] sm:$0xf]
      %v386 = vld [vmem:[%s3 + $0x3c] sm:$0xf]
      %v387 = vld [vmem:[%s4] sm:$0x1]
      %v389 = vlaneseq
      %v390 = vshrl.u32 %v389, 7
      %v391 = vsub.s32 0, %v390
      %v392 = vrot.slane %v387, %v391
      %v410 = vunpack.c.l.b16 %v371
      %v411 = vunpack.c.l.b16 %v372
      %v412 = vunpack.c.l.b16 %v373
      %v413 = vunpack.c.l.b16 %v374
      %v414 = vunpack.c.l.b16 %v375
      %v415 = vunpack.c.l.b16 %v376
      %v416 = vunpack.c.l.b16 %v377
      %v417 = vunpack.c.l.b16 %v378
      %v418 = vunpack.c.l.b16 %v379
      %v419 = vunpack.c.l.b16 %v380
      %v420 = vunpack.c.l.b16 %v381
      %v421 = vunpack.c.l.b16 %v382
      %v422 = vunpack.c.l.b16 %v383
      %v423 = vunpack.c.l.b16 %v384
      %v424 = vunpack.c.l.b16 %v385
      %v425 = vunpack.c.l.b16 %v386
      %v426 = vpack.c.b16 %v411, %v410
      %v427 = vpack.c.b16 %v413, %v412
      %v428 = vpack.c.b16 %v415, %v414
      %v429 = vpack.c.b16 %v417, %v416
      %v430 = vpack.c.b16 %v419, %v418
      %v431 = vpack.c.b16 %v421, %v420
      %v432 = vpack.c.b16 %v423, %v422
      %v433 = vpack.c.b16 %v425, %v424
      %442 = vmatprep.subr.bf16.mxu0 0
      %443 = vmatpush1.bf16.msra.mxu0 %v426
      %444 = vmatprep.subr.bf16.mxu0 0
      %445 = vmatpush1.bf16.msra.mxu0 %v427
      %446 = vmatprep.subr.bf16.mxu0 0
      %447 = vmatpush1.bf16.msra.mxu0 %v428
      %448 = vmatprep.subr.bf16.mxu0 0
      %449 = vmatpush1.bf16.msra.mxu0 %v429
      %450 = vmatprep.subr.bf16.mxu0 0
      %451 = vmatpush1.bf16.msra.mxu0 %v430
      %452 = vmatprep.subr.bf16.mxu0 0
      %453 = vmatpush1.bf16.msra.mxu0 %v431
      %454 = vmatprep.subr.bf16.mxu0 0
      %455 = vmatpush1.bf16.msra.mxu0 %v432
      %456 = vmatprep.subr.bf16.mxu0 0
      %457 = vmatpush1.bf16.msra.mxu0 %v433
      %458 = vmatprep.subr.bf16.mxu0 0
      %459 = vmatpush1.bf16.msra.mxu0 0
      %460 = vmatprep.subr.bf16.mxu0 0
      %461 = vmatpush1.bf16.msra.mxu0 0
      %462 = vmatprep.subr.bf16.mxu0 0
      %463 = vmatpush1.bf16.msra.mxu0 0
      %464 = vmatprep.subr.bf16.mxu0 0
      %465 = vmatpush1.bf16.msra.mxu0 0
      %466 = vmatprep.subr.bf16.mxu0 0
      %467 = vmatpush1.bf16.msra.mxu0 0
      %468 = vmatprep.subr.bf16.mxu0 0
      %469 = vmatpush1.bf16.msra.mxu0 0
      %470 = vmatprep.subr.bf16.mxu0 0
      %471 = vmatpush1.bf16.msra.mxu0 0
      %472 = vmatprep.subr.bf16.mxu0 0
      %473 = vmatpush1.bf16.msra.mxu0 0
      %474 = vmatprep.mubr.bf16.mxu0 0
      %475 = vmatmul.mubr.bf16.gmra.mrb[0].mxu0 %v369
      %v476 = vpop.f32.mrb[0].mxu0
      %v477 = vadd.f32 %v392, %v476
      %v478 = vpop.f32.mrb[0].mxu0
      %v479 = vpop.f32.mrb[0].mxu0
      %v480 = vadd.f32 %v392, %v479
      %v481 = vpop.f32.mrb[0].mxu0
      %482 = vmatprep.mubr.bf16.mxu0 0
      %483 = vmatmul.mubr.bf16.gmra.mrb[0].mxu0 %v370
      %v484 = vpop.f32.mrb[0].mxu0
      %v485 = vadd.f32 %v392, %v484
      %v486 = vpop.f32.mrb[0].mxu0
      %v487 = vpop.f32.mrb[0].mxu0
      %v488 = vadd.f32 %v392, %v487
      %v489 = vpop.f32.mrb[0].mxu0
      %490 = vdwg.mxu0
      %v491 = vxor.u32 %v477, 2147483648
      %v492 = vxor.u32 %v480, 2147483648
      %v493 = vxor.u32 %v485, 2147483648
      %v494 = vxor.u32 %v488, 2147483648
      %v495 = vmul.f32 %v491, 1.442695
      %v496 = vpow.pop %v495
      %v497 = vmul.f32 %v492, 1.442695
      %v498 = vpow.pop %v497
      %v499 = vmul.f32 %v493, 1.442695
      %v500 = vpow.pop %v499
      %v501 = vmul.f32 %v494, 1.442695
      %v502 = vpow.pop %v501
      %v503 = vadd.f32 %v496, 1.0
      %v504 = vadd.f32 %v498, 1.0
      %v505 = vadd.f32 %v500, 1.0
      %v506 = vadd.f32 %v502, 1.0
      %v507 = vrcp.pop %v503
      %v508 = vmul.f32 1.0, %v507
      %v509 = vrcp.pop %v504
      %v510 = vmul.f32 1.0, %v509
      %v511 = vrcp.pop %v505
      %v512 = vmul.f32 1.0, %v511
      %v513 = vrcp.pop %v506
      %v514 = vmul.f32 1.0, %v513
      %v515 = vpack.c.bf16 %v510, %v508
      %v516 = vpack.c.bf16 %v514, %v512
      %v519 = vunpack.c.l.b16 %v515
      %v520 = vunpack.c.h.b16 %v515
      %v521 = vunpack.c.l.b16 %v516
      %v522 = vunpack.c.h.b16 %v516
      %v523 = vpack.c.b16 %v519, %v519
      %v524 = vpack.c.b16 %v520, %v520
      %v525 = vpack.c.b16 %v521, %v521
      %v526 = vpack.c.b16 %v522, %v522
      %531 = vst [vmem:[%s226] sm:$0xf] %v523
      %532 = vst [vmem:[%s226 + $0x4] sm:$0xf] %v524
      %533 = vst [vmem:[%s226 + $0x8] sm:$0xf] %v525
      %534 = vst [vmem:[%s226 + $0xc] sm:$0xf] %v526
      %s535 = smul.u32 4, %s16
      %p536 = scmp.lt.s32.totalorder %s535, 15
      %s537 = scalar_select %p536, %s535, 15
      %s538 = smul.addr %s537, 4
      %s539 = scalar_lea.vmem %s5, %s538
      // Predicated region
      $region41: #{autoencoder_forward.1} parent=39 // pred_check
        %p540 = pneg %p144
      $region42: #{autoencoder_forward.1} parent=39 // pred_check_branch
        %542 = sbr.rel (%p540) target = $region44
      $region43: #{autoencoder_forward.1} parent=39 // pred_region
        %s543 = smul.u32 4, %s16
      $region44: #{autoencoder_forward.1} parent=39 // pred_fallthru
        _
    $region40: #{autoencoder_forward.1} parent=5 // pred_fallthru
      _
    %p544 = scmp.le.s32.totalorder 2, %s11
    // Predicated region
    $region45: #{autoencoder_forward.1} parent=5 // pred_check
      %p545 = pneg %p544
    $region46: #{autoencoder_forward.1} parent=5 // pred_check_branch
      %547 = sbr.rel (%p545) target = $region48
    $region47: #{autoencoder_forward.1} parent=5 // pred_region
      %s548 = ssub.s32 %s11, 2
      // Predicated region
      $region49: #{autoencoder_forward.1} parent=47 // pred_check
        %p549 = pneg %p150
      $region50: #{autoencoder_forward.1} parent=47 // pred_check_branch
        %551 = sbr.rel (%p549) target = $region52
      $region51: #{autoencoder_forward.1} parent=47 // pred_region
        %s552 = smul.u32 4, %s17
        %p553 = scmp.lt.s32.totalorder %s552, 15
        %s554 = scalar_select %p553, %s552, 15
        %s555 = smul.addr %s554, 4
        %s556 = scalar_lea.vmem %s5, %s555
      $region52: #{autoencoder_forward.1} parent=47 // pred_fallthru
        _
    $region48: #{autoencoder_forward.1} parent=5 // pred_fallthru
      _
  $region6: #{autoencoder_forward.1} parent=0 // loop_footer
    %s15 = sadd.s32 1, %s11
  $region7: #{autoencoder_forward.1} parent=0 // loop_footer_branch
    %10 = sbr.rel target = $region3
  $region8: #{autoencoder_forward.1} parent=0 // loop_exit
    _

</llo_original>
